<compile_context>
chip_gen: v7x
topology: tpu7x:2x2x1
jax: 0.10.0
libtpu: 0.0.40
codegen_flags: <defaults>
</compile_context>

<pallas_src>
import functools

import jax
import jax.numpy as jnp
from jax.experimental import pallas as pl
from jax.experimental.pallas import tpu as pltpu


def _round_up(x, m):
    return (x + m - 1) // m * m


def _swiglu_ffn_kernel(x_ref, w13_ref, w2_ref, o_ref, acc_ref, *, th):
    # x_ref:   (TM, dim)     bf16 input rows (same tile for every hidden step)
    # w13_ref: (dim, 2*th)   fused [W1^T tile j | W3^T tile j]
    # w2_ref:  (th, dim)     W2^T rows for hidden tile j
    # o_ref:   (TM, dim)     output tile (written on the last hidden step)
    # acc_ref: (TM, dim) f32 down-projection accumulator
    j = pl.program_id(1)

    @pl.when(j == 0)
    def _():
        acc_ref[...] = jnp.zeros_like(acc_ref)

    # One fused MXU GEMM gives gate and up projections lane-adjacent, f32 acc.
    h13 = jnp.dot(x_ref[...], w13_ref[...], preferred_element_type=jnp.float32)
    h1 = h13[:, :th]          # tile-aligned slices (th is a multiple of 128
    h3 = h13[:, th:]          # for LLaMA dims), so no layout shuffles.
    gated = (h1 * jax.nn.sigmoid(h1)) * h3  # SiLU(gate) * up, in f32

    # Partial down-projection for this hidden tile, accumulated in f32.
    acc_ref[...] += jnp.dot(gated.astype(w2_ref.dtype), w2_ref[...],
                            preferred_element_type=jnp.float32)

    @pl.when(j == pl.num_programs(1) - 1)
    def _():
        o_ref[...] = acc_ref[...].astype(o_ref.dtype)


def pick_hidden_tile(hidden):
    """Largest of 512/256/128 dividing hidden (LLaMA hidden is a multiple of 128)."""
    for th in (512, 256, 128):
        if hidden % th == 0:
            return th
    return hidden


def _pick_row_tile(M, dim, th, out_itemsize, vmem_budget=40 * 1024 * 1024):
    """Largest row tile whose working set fits the VMEM budget (v7x-safe)."""
    weight_bytes = 2 * (dim * 2 * th) * 2 + 2 * (th * dim) * 2   # double-buffered bf16 tiles
    for tm in (1024, 512, 256, 128, 64, 32, 16, 8):
        row_bytes = (2 * tm * dim * 2            # x tile, bf16, double-buffered
                     + tm * dim * 4              # f32 accumulator
                     + 2 * tm * dim * out_itemsize)  # output tile, double-buffered
        if weight_bytes + row_bytes <= vmem_budget:
            return min(tm, _round_up(M, 8))
    return min(8, _round_up(M, 8))


def prepare_ffn_weights(w1, w2, w3, *, th, compute_dtype=jnp.bfloat16):
    """One-time weight prep (do this at init, NOT per forward call).

    w1, w3: (hidden, dim)  PyTorch (out, in) layout; w2: (dim, hidden).
    Returns:
      w13: (dim, 2*hidden) bf16 -- per hidden tile j, columns [2*j*th, 2*(j+1)*th)
           hold [W1^T tile j | W3^T tile j] so one GEMM computes both projections.
      w2t: (hidden, dim)   bf16 -- W2 transposed to (in, out).
    """
    hidden, dim = w1.shape
    assert hidden % th == 0, "hidden tile must divide hidden"
    n = hidden // th
    w1t = jnp.transpose(w1).reshape(dim, n, th)
    w3t = jnp.transpose(w3).reshape(dim, n, th)
    w13 = jnp.concatenate([w1t, w3t], axis=-1).reshape(dim, 2 * hidden)
    return w13.astype(compute_dtype), jnp.transpose(w2).astype(compute_dtype)


@functools.partial(jax.jit, static_argnames=("th", "tm"))
def feed_forward(x, w13, w2t, *, th, tm=None):
    """x: (B, S, dim); w13: (dim, 2*hidden); w2t: (hidden, dim) (from prepare_ffn_weights)."""
    B, S, dim = x.shape
    hidden = w2t.shape[0]
    M = B * S
    compute_dtype = w13.dtype
    out_itemsize = jnp.dtype(x.dtype).itemsize

    x2d = x.reshape(M, dim).astype(compute_dtype)

    # Row tile: as large as the VMEM budget allows, shrunk (to a multiple of 8)
    # for tiny M; pad rows instead of asserting divisibility.
    tm_eff = tm if tm is not None else _pick_row_tile(M, dim, th, out_itemsize)
    tm_eff = min(tm_eff, _round_up(M, 8))
    m_pad = _round_up(M, tm_eff)
    if m_pad != M:
        x2d = jnp.pad(x2d, ((0, m_pad - M), (0, 0)))

    grid = (m_pad // tm_eff, hidden // th)

    cost = pl.CostEstimate(
        flops=6 * m_pad * dim * hidden,            # gate+up GEMM + down GEMM
        transcendentals=m_pad * hidden,            # sigmoid
        bytes_accessed=(x2d.size * x2d.dtype.itemsize
                        + w13.size * w13.dtype.itemsize
                        + w2t.size * w2t.dtype.itemsize
                        + m_pad * dim * out_itemsize),
    )

    out2d = pl.pallas_call(
        functools.partial(_swiglu_ffn_kernel, th=th),
        out_shape=jax.ShapeDtypeStruct((m_pad, dim), x.dtype),
        grid_spec=pltpu.PrefetchScalarGridSpec(
            num_scalar_prefetch=0,
            grid=grid,
            in_specs=[
                pl.BlockSpec((tm_eff, dim), lambda i, j: (i, 0)),      # x rows (resident over j)
                pl.BlockSpec((dim, 2 * th), lambda i, j: (0, j)),      # fused W1/W3 tile
                pl.BlockSpec((th, dim), lambda i, j: (j, 0)),          # W2^T tile
            ],
            out_specs=pl.BlockSpec((tm_eff, dim), lambda i, j: (i, 0)),
            scratch_shapes=[pltpu.VMEM((tm_eff, dim), jnp.float32)],   # f32 accumulator
        ),
        compiler_params=pltpu.CompilerParams(
            dimension_semantics=("parallel", "arbitrary"),
            vmem_limit_bytes=48 * 1024 * 1024,     # safe on v7x's 64 MiB VMEM
        ),
        cost_estimate=cost,
    )(x2d, w13, w2t)

    if m_pad != M:
        out2d = out2d[:M]
    return out2d.reshape(B, S, dim)


def _reference(x, w1, w2, w3):
    # Pure-JAX f32 reference replicating the PyTorch forward exactly.
    h1 = jnp.einsum("bsd,hd->bsh", x, w1)
    h3 = jnp.einsum("bsd,hd->bsh", x, w3)
    g = h1 * jax.nn.sigmoid(h1) * h3
    return jnp.einsum("bsh,dh->bsd", g, w2)


if __name__ == "__main__":
    # Module hyper-params (small but consistent with FeedForward.__init__ math):
    dim = 128
    hidden_dim_arg = 4 * dim          # 512
    multiple_of = 128
    ffn_dim_multiplier = None

    # Replicate __init__ hidden_dim computation.
    hidden_dim = int(2 * hidden_dim_arg / 3)          # 341
    if ffn_dim_multiplier is not None:
        hidden_dim = int(ffn_dim_multiplier * hidden_dim)
    hidden_dim = multiple_of * ((hidden_dim + multiple_of - 1) // multiple_of)  # 384

    batch, seq = 2, 8

    key = jax.random.PRNGKey(0)
    kx, k1, k2, k3 = jax.random.split(key, 4)
    x = jax.random.normal(kx, (batch, seq, dim), dtype=jnp.float32)
    # PyTorch nn.Linear weight layout is (out_features, in_features).
    w1 = jax.random.normal(k1, (hidden_dim, dim), dtype=jnp.float32) * 0.02
    w2 = jax.random.normal(k2, (dim, hidden_dim), dtype=jnp.float32) * 0.02
    w3 = jax.random.normal(k3, (hidden_dim, dim), dtype=jnp.float32) * 0.02

    # One-time weight preparation (fused + transposed + bf16).
    th = pick_hidden_tile(hidden_dim)                 # 128 here -> exercises accumulation
    w13, w2t = prepare_ffn_weights(w1, w2, w3, th=th)

    out = feed_forward(x, w13, w2t, th=th)
    out = jax.block_until_ready(out)

    ref = _reference(x, w1, w2, w3)
    assert out.shape == (batch, seq, dim)
    # bf16 matmul operands with f32 accumulation -> looser tolerance vs f32 reference.
    assert jnp.allclose(out, ref, atol=2e-2, rtol=2e-2), (
        f"mismatch vs reference, max abs err {jnp.max(jnp.abs(out - ref))}")

    print("KERNEL_OK")
</pallas_src>

<mosaic_0001>
module attributes {stable_mosaic.version = 11 : i64} {
  func.func @_swiglu_ffn_kernel(%arg0: i32, %arg1: i32, %arg2: memref<16x128xbf16, #tpu.memory_space<vmem>>, %arg3: memref<128x256xbf16, #tpu.memory_space<vmem>>, %arg4: memref<128x128xbf16, #tpu.memory_space<vmem>>, %arg5: memref<16x128xf32, #tpu.memory_space<vmem>>, %arg6: memref<16x128xf32, #tpu.memory_space<vmem>>) attributes {dimension_semantics = [#tpu.dimension_semantics<parallel>, #tpu.dimension_semantics<arbitrary>], iteration_bounds = array<i64: 1, 3>, scalar_prefetch = 0 : i64, scratch_operands = 1 : i64, tpu.core_type = #tpu.core_type<tc>, window_params = [{transform_indices = @transform_0, window_bounds = array<i64: 16, 128>}, {transform_indices = @transform_1, window_bounds = array<i64: 128, 256>}, {transform_indices = @transform_2, window_bounds = array<i64: 128, 128>}, {transform_indices = @transform_3, window_bounds = array<i64: 16, 128>}]} {
    %c0_i32 = arith.constant 0 : i32
    %0 = arith.cmpi eq, %arg1, %c0_i32 : i32
    %1 = arith.extui %0 : i1 to i32
    %c0_i32_0 = arith.constant 0 : i32
    %2 = arith.cmpi ne, %1, %c0_i32_0 : i32
    scf.if %2 {
      %cst_13 = arith.constant 0.000000e+00 : f32
      %24 = vector.broadcast %cst_13 : f32 to vector<16x128xf32>
      %c0_14 = arith.constant 0 : index
      %c0_15 = arith.constant 0 : index
      %25 = vector.load %arg6[%c0_14, %c0_15] : memref<16x128xf32, #tpu.memory_space<vmem>>, vector<16x128xf32>
      tpu.vector_store %arg6[%c0_14, %c0_15], %24 {strides = array<i32>} : memref<16x128xf32, #tpu.memory_space<vmem>>, vector<16x128xf32>,
    } else {
    }
    %c0 = arith.constant 0 : index
    %c0_1 = arith.constant 0 : index
    %3 = vector.load %arg2[%c0, %c0_1] : memref<16x128xbf16, #tpu.memory_space<vmem>>, vector<16x128xbf16>
    %c0_2 = arith.constant 0 : index
    %c0_3 = arith.constant 0 : index
    %4 = vector.load %arg3[%c0_2, %c0_3] : memref<128x256xbf16, #tpu.memory_space<vmem>>, vector<128x256xbf16>
    %cst = arith.constant dense<0.000000e+00> : vector<16x256xf32>
    %5 = tpu.matmul %3, %4, %cst {dimension_numbers = #tpu.dot_dimension_numbers<[1], [0], [0], [1], [0, 0, 1, 1], [], []>} : vector<16x128xbf16>, vector<128x256xbf16>, vector<16x256xf32> -> vector<16x256xf32>
    %6 = vector.extract_strided_slice %5 {offsets = [0, 0], sizes = [16, 128], strides = [1, 1]} : vector<16x256xf32> to vector<16x128xf32>
    %7 = vector.extract_strided_slice %5 {offsets = [0, 128], sizes = [16, 128], strides = [1, 1]} : vector<16x256xf32> to vector<16x128xf32>
    %8 = arith.negf %6 : vector<16x128xf32>
    %9 = math.exp %8 : vector<16x128xf32>
    %cst_4 = arith.constant 1.000000e+00 : f32
    %10 = vector.broadcast %cst_4 : f32 to vector<16x128xf32>
    %11 = arith.addf %10, %9 : vector<16x128xf32>
    %12 = arith.divf %10, %11 : vector<16x128xf32>
    %13 = arith.mulf %6, %12 : vector<16x128xf32>
    %14 = arith.mulf %13, %7 : vector<16x128xf32>
    %c0_5 = arith.constant 0 : index
    %c0_6 = arith.constant 0 : index
    %15 = vector.load %arg6[%c0_5, %c0_6] : memref<16x128xf32, #tpu.memory_space<vmem>>, vector<16x128xf32>
    %16 = arith.truncf %14 : vector<16x128xf32> to vector<16x128xbf16>
    %c0_7 = arith.constant 0 : index
    %c0_8 = arith.constant 0 : index
    %17 = vector.load %arg4[%c0_7, %c0_8] : memref<128x128xbf16, #tpu.memory_space<vmem>>, vector<128x128xbf16>
    %cst_9 = arith.constant dense<0.000000e+00> : vector<16x128xf32>
    %18 = tpu.matmul %16, %17, %cst_9 {dimension_numbers = #tpu.dot_dimension_numbers<[1], [0], [0], [1], [0, 0, 1, 1], [], []>} : vector<16x128xbf16>, vector<128x128xbf16>, vector<16x128xf32> -> vector<16x128xf32>
    %19 = arith.addf %15, %18 : vector<16x128xf32>
    %c0_10 = arith.constant 0 : index
    %c0_11 = arith.constant 0 : index
    %20 = vector.load %arg6[%c0_10, %c0_11] : memref<16x128xf32, #tpu.memory_space<vmem>>, vector<16x128xf32>
    tpu.vector_store %arg6[%c0_10, %c0_11], %19 {strides = array<i32>} : memref<16x128xf32, #tpu.memory_space<vmem>>, vector<16x128xf32>,
    %c2_i32 = arith.constant 2 : i32
    %21 = arith.cmpi eq, %arg1, %c2_i32 : i32
    %22 = arith.extui %21 : i1 to i32
    %c0_i32_12 = arith.constant 0 : i32
    %23 = arith.cmpi ne, %22, %c0_i32_12 : i32
    scf.if %23 {
      %c0_13 = arith.constant 0 : index
      %c0_14 = arith.constant 0 : index
      %24 = vector.load %arg6[%c0_13, %c0_14] : memref<16x128xf32, #tpu.memory_space<vmem>>, vector<16x128xf32>
      %c0_15 = arith.constant 0 : index
      %c0_16 = arith.constant 0 : index
      %25 = vector.load %arg5[%c0_15, %c0_16] : memref<16x128xf32, #tpu.memory_space<vmem>>, vector<16x128xf32>
      tpu.vector_store %arg5[%c0_15, %c0_16], %24 {strides = array<i32>} : memref<16x128xf32, #tpu.memory_space<vmem>>, vector<16x128xf32>,
    } else {
    }
    return
  }
  func.func @transform_0(%arg0: i32, %arg1: i32) -> (i32, i32) {
    %c0_i32 = arith.constant 0 : i32
    %c0_i32_0 = arith.constant 0 : i32
    return %arg0, %c0_i32 : i32, i32
  }
  func.func @transform_1(%arg0: i32, %arg1: i32) -> (i32, i32) {
    %c0_i32 = arith.constant 0 : i32
    %c0_i32_0 = arith.constant 0 : i32
    return %c0_i32, %arg1 : i32, i32
  }
  func.func @transform_2(%arg0: i32, %arg1: i32) -> (i32, i32) {
    %c0_i32 = arith.constant 0 : i32
    %c0_i32_0 = arith.constant 0 : i32
    return %arg1, %c0_i32 : i32, i32
  }
  func.func @transform_3(%arg0: i32, %arg1: i32) -> (i32, i32) {
    %c0_i32 = arith.constant 0 : i32
    %c0_i32_0 = arith.constant 0 : i32
    return %arg0, %c0_i32 : i32, i32
  }
}

</mosaic_0001>

<llo_original>
// kernel: feed_forward.1
$region0: #{feed_forward.1}
  #allocation0 [shape = 'u32[]', space=smem, size = 0x4, offset = 0x4, fixed_abs, tag = 'smem constant byte address 0x4 - core index']
  #allocation1 [shape = 'u32[144,128]{1,0:T(1,128)}', space=vmem, size = 0x12000, scoped, tag = 'internal scratch']
  #allocation2 [shape = 'f32[16,128]{1,0:T(8,128)}', space=vmem, size = 0x2000, scoped, tag = 'scratch operand']
  %s0 = inlined_call_operand.vmem [shape: bf16[16,128], index: 0, kind: input, shape index: {}]
  %s1 = inlined_call_operand.hbm [shape: bf16[128,768], index: 1, kind: input, shape index: {}]
  %s2 = inlined_call_operand.hbm [shape: bf16[384,128], index: 2, kind: input, shape index: {}]
  %s3 = inlined_call_operand.hbm [shape: f32[16,128], index: 3, kind: output, shape index: {}]
  %s4 = sld [smem:[#allocation0]]
  $region61: #{feed_forward.1} parent=0
    _
  %s6 = ssub.s32 1, %s4
  %s7 = scalar_select 0, %s6, %s4
  $region1: #{feed_forward.1} parent=0
    #allocation3 [shape = 'u8[131072]{0}', space=vmem, size = 0x20000, scoped, tag = 'input window, operand 1']
    #allocation4 [shape = 's32[2]{0}', space=sflag, size = 0x8, scoped, tag = 'scoped memory for feed_forward.1']
    #allocation5 [shape = 's32[2]{0}', space=sflag, size = 0x8, scoped, tag = 'scoped memory for feed_forward.1']
    #allocation6 [shape = 'u8[65536]{0}', space=vmem, size = 0x10000, scoped, tag = 'input window, operand 2']
    #allocation7 [shape = 's32[2]{0}', space=sflag, size = 0x8, scoped, tag = 'scoped memory for feed_forward.1']
    #allocation8 [shape = 'u8[8192]{0}', space=vmem, size = 0x2000, scoped, tag = 'output window, operand 0, single buffered']
    %8 = vsyncpa [#allocation4], 0
    %s9 = scalar_lea.sflag [#allocation4], 1
    %10 = vsyncpa %s9, 0
    %11 = vsyncpa [#allocation7], 0
    %s12 = scalar_lea.sflag [#allocation7], 1
    %13 = vsyncpa %s12, 0
    %14 = vsyncpa [#allocation5], 0
    loop: start=0, step=1, limit=5
    $region2: #{feed_forward.1} parent=1 // loop_pre_header
      _
    $region3: #{feed_forward.1} parent=1 // loop_header
      %s16 = sphi 0, %s20
      %p17 = scmp.ge.s32.totalorder %s16, 5
      %s23 = sphi 0, %s35
      %s24 = sphi 0, %s31
      %s25 = sphi 0, %s23
      %s26 = sphi 0, %s24
      %s27 = sphi 0, %s25
      %s28 = sphi 0, %s26
      %s38 = sphi 0, %s40
      %s41 = sphi 0, %s38
      %s42 = sphi 0, %s41
      %s58 = sphi 0, %s42
      %s64 = sphi 0, %s66
      %s67 = sphi 0, %s64
      %s68 = sphi 0, %s67
      %s84 = sphi 0, %s68
      %s90 = sphi 0, %s92
      %s93 = sphi 0, %s90
      %s94 = sphi 0, %s93
      %s110 = sphi 0, %s94
      %s116 = sphi 0, %s118
      %s119 = sphi 0, %s116
      %s120 = sphi 0, %s119
      %s136 = sphi 0, %s120
    $region4: #{feed_forward.1} parent=1 // loop_header_branch
      %19 = sbr.rel (%p17) target = $region8
    $region5: #{feed_forward.1} parent=1 // loop_body
      %s21 = ssub.s32 %s16, 1
      %s22 = ssub.s32 %s16, 2
      %s29 = sadd.s32 1, %s24
      %p30 = scmp.ge.s32.totalorder %s29, 3
      %s31 = scalar_select %p30, 0, %s29
      %s32 = sadd.s32 1, %s23
      %s33 = scalar_select %p30, %s32, %s23
      %p34 = scmp.ge.s32.totalorder %s33, 1
      %s35 = scalar_select %p34, 0, %s33
      %s36 = ssub.s32 %s23, %s35
      %p37 = scmp.eq.s32.totalorder %s36, 0
      %s39 = sadd.s32 %s38, 1
      %s40 = scalar_select %p37, %s38, %s39
      %p43 = pneg %p37
      %p44 = scmp.eq.s32.totalorder %s16, 2
      %p45 = por %p43, %p44
      %p46 = scmp.ne.s32.totalorder %s38, %s41
      %p47 = scmp.eq.s32.totalorder %s16, 0
      %p48 = por %p46, %p47
      %p49 = scmp.ne.s32.totalorder %s38, %s41
      %p50 = scmp.eq.s32.totalorder %s21, 2
      %p51 = por %p49, %p50
      %p52 = scmp.ne.s32.totalorder %s41, %s42
      %p53 = scmp.eq.s32.totalorder %s21, 0
      %p54 = por %p52, %p53
      %p55 = scmp.ne.s32.totalorder %s41, %s42
      %p56 = scmp.eq.s32.totalorder %s22, 2
      %p57 = por %p55, %p56
      %p59 = scmp.ne.s32.totalorder %s42, %s58
      %p60 = scmp.eq.s32.totalorder %s22, 0
      %p61 = por %p59, %p60
      %s62 = ssub.s32 %s24, %s31
      %p63 = scmp.eq.s32.totalorder %s62, 0
      %s65 = sadd.s32 %s64, 1
      %s66 = scalar_select %p63, %s64, %s65
      %p69 = pneg %p63
      %p70 = scmp.eq.s32.totalorder %s16, 2
      %p71 = por %p69, %p70
      %p72 = scmp.ne.s32.totalorder %s64, %s67
      %p73 = scmp.eq.s32.totalorder %s16, 0
      %p74 = por %p72, %p73
      %p75 = scmp.ne.s32.totalorder %s64, %s67
      %p76 = scmp.eq.s32.totalorder %s21, 2
      %p77 = por %p75, %p76
      %p78 = scmp.ne.s32.totalorder %s67, %s68
      %p79 = scmp.eq.s32.totalorder %s21, 0
      %p80 = por %p78, %p79
      %p81 = scmp.ne.s32.totalorder %s67, %s68
      %p82 = scmp.eq.s32.totalorder %s22, 2
      %p83 = por %p81, %p82
      %p85 = scmp.ne.s32.totalorder %s68, %s84
      %p86 = scmp.eq.s32.totalorder %s22, 0
      %p87 = por %p85, %p86
      %s88 = ssub.s32 %s24, %s31
      %p89 = scmp.eq.s32.totalorder %s88, 0
      %s91 = sadd.s32 %s90, 1
      %s92 = scalar_select %p89, %s90, %s91
      %p95 = pneg %p89
      %p96 = scmp.eq.s32.totalorder %s16, 2
      %p97 = por %p95, %p96
      %p98 = scmp.ne.s32.totalorder %s90, %s93
      %p99 = scmp.eq.s32.totalorder %s16, 0
      %p100 = por %p98, %p99
      %p101 = scmp.ne.s32.totalorder %s90, %s93
      %p102 = scmp.eq.s32.totalorder %s21, 2
      %p103 = por %p101, %p102
      %p104 = scmp.ne.s32.totalorder %s93, %s94
      %p105 = scmp.eq.s32.totalorder %s21, 0
      %p106 = por %p104, %p105
      %p107 = scmp.ne.s32.totalorder %s93, %s94
      %p108 = scmp.eq.s32.totalorder %s22, 2
      %p109 = por %p107, %p108
      %p111 = scmp.ne.s32.totalorder %s94, %s110
      %p112 = scmp.eq.s32.totalorder %s22, 0
      %p113 = por %p111, %p112
      %s114 = ssub.s32 %s23, %s35
      %p115 = scmp.eq.s32.totalorder %s114, 0
      %s117 = sadd.s32 %s116, 1
      %s118 = scalar_select %p115, %s116, %s117
      %p121 = pneg %p115
      %p122 = scmp.eq.s32.totalorder %s16, 2
      %p123 = por %p121, %p122
      %p124 = scmp.ne.s32.totalorder %s116, %s119
      %p125 = scmp.eq.s32.totalorder %s16, 0
      %p126 = por %p124, %p125
      %p127 = scmp.ne.s32.totalorder %s116, %s119
      %p128 = scmp.eq.s32.totalorder %s21, 2
      %p129 = por %p127, %p128
      %p130 = scmp.ne.s32.totalorder %s119, %s120
      %p131 = scmp.eq.s32.totalorder %s21, 0
      %p132 = por %p130, %p131
      %p133 = scmp.ne.s32.totalorder %s119, %s120
      %p134 = scmp.eq.s32.totalorder %s22, 2
      %p135 = por %p133, %p134
      %p137 = scmp.ne.s32.totalorder %s120, %s136
      %p138 = scmp.eq.s32.totalorder %s22, 0
      %p139 = por %p137, %p138
      %p140 = scmp.le.s32.totalorder 1, %s16
      %p141 = scmp.lt.s32.totalorder %s16, 4
      %p142 = pnand %p140, %p141
      %p143 = pneg %p142
      // Predicated region
      $region9: #{feed_forward.1} parent=5 // pred_check
        _
      $region10: #{feed_forward.1} parent=5 // pred_check_branch
        %145 = sbr.rel (%p142) target = $region12
      $region11: #{feed_forward.1} parent=5 // pred_region
        %s146 = ssub.s32 %s16, 1
        // Predicated region
        $region13: #{feed_forward.1} parent=11 // pred_check
          %p147 = pneg %p54
        $region14: #{feed_forward.1} parent=11 // pred_check_branch
          %149 = sbr.rel (%p147) target = $region16
        $region15: #{feed_forward.1} parent=11 // pred_region
          %s150 = smul.u32 2, %s25
          %p151 = scmp.lt.s32.totalorder %s150, 1
          %s152 = scalar_select %p151, %s150, 1
          %s153 = smul.addr %s152, 4
          %s154 = scalar_lea.vmem %s0, %s153
          %s155 = smul.u32 2, %s25
        $region16: #{feed_forward.1} parent=11 // pred_fallthru
          _
      $region12: #{feed_forward.1} parent=5 // pred_fallthru
        _
      %p156 = scmp.lt.s32.totalorder %s16, 3
      // Predicated region
      $region17: #{feed_forward.1} parent=5 // pred_check
        %p157 = pneg %p156
      $region18: #{feed_forward.1} parent=5 // pred_check_branch
        %159 = sbr.rel (%p157) target = $region20
      $region19: #{feed_forward.1} parent=5 // pred_region
        // Predicated region
        $region21: #{feed_forward.1} parent=19 // pred_check
          %p160 = pneg %p74
        $region22: #{feed_forward.1} parent=19 // pred_check_branch
          %162 = sbr.rel (%p160) target = $region24
        $region23: #{feed_forward.1} parent=19 // pred_region
          %s163 = sand.u32 %s64, 1
          %s164 = scalar_lea.sflag [#allocation4], %s163
          %s165 = sand.u32 %s64, 1
          %s166 = smul.addr %s165, 128
          %s167 = scalar_lea.vmem [#allocation3], %s166
          %s168 = smul.u32 2, %s24
          %s170 = ssub.s32 2048, 2048
          %171 = vsyncadd %s164, %s170
          %s172 = smul.addr %s168, 64
          %s173 = scalar_lea.hbm %s1, %s172
          %s174 = sshll.u32 %s167, 4
          %s175 = int_to_ptr.vmem [resolvable:$true] %s174
          %180 = dma.hbm_to_vmem [thread:$0]  %s173, 2048, %s175, %s164, 384, 128, 8
        $region24: #{feed_forward.1} parent=19 // pred_fallthru
          _
        // Predicated region
        $region25: #{feed_forward.1} parent=19 // pred_check
          %p181 = pneg %p100
        $region26: #{feed_forward.1} parent=19 // pred_check_branch
          %183 = sbr.rel (%p181) target = $region28
        $region27: #{feed_forward.1} parent=19 // pred_region
          %s184 = sand.u32 %s90, 1
          %s185 = scalar_lea.sflag [#allocation7], %s184
          %s186 = sand.u32 %s90, 1
          %s187 = smul.addr %s186, 64
          %s188 = scalar_lea.vmem [#allocation6], %s187
          %s189 = smul.u32 16, %s24
          %s191 = ssub.s32 1024, 1024
          %192 = vsyncadd %s185, %s191
          %s193 = smul.addr %s189, 64
          %s194 = scalar_lea.hbm %s2, %s193
          %s195 = sshll.u32 %s188, 4
          %s196 = int_to_ptr.vmem [resolvable:$true] %s195
          %201 = dma.hbm_to_vmem [thread:$0]  %s194, 1024, %s196, %s185, 64, 64, 4
        $region28: #{feed_forward.1} parent=19 // pred_fallthru
          _
      $region20: #{feed_forward.1} parent=5 // pred_fallthru
        _
      %p202 = scmp.le.s32.totalorder 1, %s16
      %p203 = scmp.lt.s32.totalorder %s16, 4
      %p204 = pnand %p202, %p203
      %p205 = pneg %p204
      // Predicated region
      $region29: #{feed_forward.1} parent=5 // pred_check
        _
      $region30: #{feed_forward.1} parent=5 // pred_check_branch
        %207 = sbr.rel (%p204) target = $region32
      $region31: #{feed_forward.1} parent=5 // pred_region
        %s208 = ssub.s32 %s16, 1
        %s209 = sand.u32 %s67, 1
        %s210 = scalar_lea.sflag [#allocation4], %s209
        %s211 = sand.u32 %s67, 1
        %s212 = smul.addr %s211, 128
        %s213 = scalar_lea.vmem [#allocation3], %s212
        // Predicated region
        $region33: #{feed_forward.1} parent=31 // pred_check
          %p214 = pneg %p80
        $region34: #{feed_forward.1} parent=31 // pred_check_branch
          %216 = sbr.rel (%p214) target = $region36
        $region35: #{feed_forward.1} parent=31 // pred_region
          %217 = dma.done %s210, 2048
        $region36: #{feed_forward.1} parent=31 // pred_fallthru
          _
        %s218 = sand.u32 %s93, 1
        %s219 = scalar_lea.sflag [#allocation7], %s218
        %s220 = sand.u32 %s93, 1
        %s221 = smul.addr %s220, 64
        %s222 = scalar_lea.vmem [#allocation6], %s221
        // Predicated region
        $region37: #{feed_forward.1} parent=31 // pred_check
          %p223 = pneg %p106
        $region38: #{feed_forward.1} parent=31 // pred_check_branch
          %225 = sbr.rel (%p223) target = $region40
        $region39: #{feed_forward.1} parent=31 // pred_region
          %226 = dma.done %s219, 1024
        $region40: #{feed_forward.1} parent=31 // pred_fallthru
          _
        %s227 = smul.u32 2, %s25
        %p228 = scmp.lt.s32.totalorder %s227, 1
        %s229 = scalar_select %p228, %s227, 1
        %s230 = smul.addr %s229, 4
        %s231 = scalar_lea.vmem %s0, %s230
        %p232 = pneg %p54
        %p233 = pneg %p51
        %s234 = sand.u32 %s67, 1
        %s235 = scalar_lea.sflag [#allocation4], %s234
        %s236 = sand.u32 %s67, 1
        %s237 = smul.addr %s236, 128
        %s238 = scalar_lea.vmem [#allocation3], %s237
        %p239 = pneg %p80
        %p240 = pneg %p77
        %s241 = sand.u32 %s93, 1
        %s242 = scalar_lea.sflag [#allocation7], %s241
        %s243 = sand.u32 %s93, 1
        %s244 = smul.addr %s243, 64
        %s245 = scalar_lea.vmem [#allocation6], %s244
        %p246 = pneg %p106
        %p247 = pneg %p103
        %p248 = pneg %p132
        %p249 = pneg %p129
        %s250 = smul.u32 2, %s25
        %p251 = scmp.lt.s32.totalorder %s250, 1
        %s252 = scalar_select %p251, %s250, 1
        %s253 = smul.addr %s252, 4
        %s254 = scalar_lea.vmem %s0, %s253
        %s255 = smul.u32 2, %s25
        %s256 = smul.u32 2, %s26
        %s257 = smul.u32 16, %s26
        %s258 = smul.u32 2, %s25
        %p260 = scmp.eq.s32.totalorder %s26, 0
        // Predicated region
        $region41: #{feed_forward.1} parent=31 // pred_check
          %p261 = pneg %p260
        $region42: #{feed_forward.1} parent=31 // pred_check_branch
          %263 = sbr.rel (%p261) target = $region44
        $region43: #{feed_forward.1} parent=31 // pred_region
          %264 = vst [vmem:[#allocation2] sm:$0xff] 0.0
          %265 = vst [vmem:[#allocation2 + $0x8] sm:$0xff] 0.0
        $region44: #{feed_forward.1} parent=31 // pred_fallthru
          _
        %v266 = vld [vmem:[%s254] sm:$0xf]
        %v267 = vld [vmem:[%s254 + $0x4] sm:$0xf]
        %v268 = vld [vmem:[%s213] sm:$0xff]
        %v269 = vld [vmem:[%s213 + $0x8] sm:$0xff]
        %v270 = vld [vmem:[%s213 + $0x10] sm:$0xff]
        %v271 = vld [vmem:[%s213 + $0x18] sm:$0xff]
        %v272 = vld [vmem:[%s213 + $0x20] sm:$0xff]
        %v273 = vld [vmem:[%s213 + $0x28] sm:$0xff]
        %v274 = vld [vmem:[%s213 + $0x30] sm:$0xff]
        %v275 = vld [vmem:[%s213 + $0x38] sm:$0xff]
        %v276 = vld [vmem:[%s213 + $0x40] sm:$0xff]
        %v277 = vld [vmem:[%s213 + $0x48] sm:$0xff]
        %v278 = vld [vmem:[%s213 + $0x50] sm:$0xff]
        %v279 = vld [vmem:[%s213 + $0x58] sm:$0xff]
        %v280 = vld [vmem:[%s213 + $0x60] sm:$0xff]
        %v281 = vld [vmem:[%s213 + $0x68] sm:$0xff]
        %v282 = vld [vmem:[%s213 + $0x70] sm:$0xff]
        %v283 = vld [vmem:[%s213 + $0x78] sm:$0xff]
        %v286 = vunpack.c.l.b16 %v266
        %v287 = vunpack.c.l.b16 %v267
        %v288 = vpack.c.b16 %v287, %v286
        %v306 = vunpack.c.l.b16 %v268
        %v307 = vunpack.c.h.b16 %v268
        %v308 = vunpack.c.l.b16 %v269
        %v309 = vunpack.c.h.b16 %v269
        %v310 = vunpack.c.l.b16 %v270
        %v311 = vunpack.c.h.b16 %v270
        %v312 = vunpack.c.l.b16 %v271
        %v313 = vunpack.c.h.b16 %v271
        %v314 = vunpack.c.l.b16 %v272
        %v315 = vunpack.c.h.b16 %v272
        %v316 = vunpack.c.l.b16 %v273
        %v317 = vunpack.c.h.b16 %v273
        %v318 = vunpack.c.l.b16 %v274
        %v319 = vunpack.c.h.b16 %v274
        %v320 = vunpack.c.l.b16 %v275
        %v321 = vunpack.c.h.b16 %v275
        %v322 = vunpack.c.l.b16 %v276
        %v323 = vunpack.c.h.b16 %v276
        %v324 = vunpack.c.l.b16 %v277
        %v325 = vunpack.c.h.b16 %v277
        %v326 = vunpack.c.l.b16 %v278
        %v327 = vunpack.c.h.b16 %v278
        %v328 = vunpack.c.l.b16 %v279
        %v329 = vunpack.c.h.b16 %v279
        %v330 = vunpack.c.l.b16 %v280
        %v331 = vunpack.c.h.b16 %v280
        %v332 = vunpack.c.l.b16 %v281
        %v333 = vunpack.c.h.b16 %v281
        %v334 = vunpack.c.l.b16 %v282
        %v335 = vunpack.c.h.b16 %v282
        %v336 = vunpack.c.l.b16 %v283
        %v337 = vunpack.c.h.b16 %v283
        %v338 = vpack.c.b16 %v308, %v306
        %v339 = vpack.c.b16 %v309, %v307
        %v340 = vpack.c.b16 %v312, %v310
        %v341 = vpack.c.b16 %v313, %v311
        %v342 = vpack.c.b16 %v316, %v314
        %v343 = vpack.c.b16 %v317, %v315
        %v344 = vpack.c.b16 %v320, %v318
        %v345 = vpack.c.b16 %v321, %v319
        %v346 = vpack.c.b16 %v324, %v322
        %v347 = vpack.c.b16 %v325, %v323
        %v348 = vpack.c.b16 %v328, %v326
        %v349 = vpack.c.b16 %v329, %v327
        %v350 = vpack.c.b16 %v332, %v330
        %v351 = vpack.c.b16 %v333, %v331
        %v352 = vpack.c.b16 %v336, %v334
        %v353 = vpack.c.b16 %v337, %v335
        %370 = vmatprep.subr.bf16.mxu0 %v339
        %371 = vmatpush1.bf16.msra.mxu0 %v338
        %372 = vmatprep.subr.bf16.mxu0 %v341
        %373 = vmatpush1.bf16.msra.mxu0 %v340
        %374 = vmatprep.subr.bf16.mxu0 %v343
        %375 = vmatpush1.bf16.msra.mxu0 %v342
        %376 = vmatprep.subr.bf16.mxu0 %v345
        %377 = vmatpush1.bf16.msra.mxu0 %v344
        %378 = vmatprep.subr.bf16.mxu0 %v347
        %379 = vmatpush1.bf16.msra.mxu0 %v346
        %380 = vmatprep.subr.bf16.mxu0 %v349
        %381 = vmatpush1.bf16.msra.mxu0 %v348
        %382 = vmatprep.subr.bf16.mxu0 %v351
        %383 = vmatpush1.bf16.msra.mxu0 %v350
        %384 = vmatprep.subr.bf16.mxu0 %v353
        %385 = vmatpush1.bf16.msra.mxu0 %v352
        %386 = vmatprep.subr.bf16.mxu0 0
        %387 = vmatpush1.bf16.msra.mxu0 0
        %388 = vmatprep.subr.bf16.mxu0 0
        %389 = vmatpush1.bf16.msra.mxu0 0
        %390 = vmatprep.subr.bf16.mxu0 0
        %391 = vmatpush1.bf16.msra.mxu0 0
        %392 = vmatprep.subr.bf16.mxu0 0
        %393 = vmatpush1.bf16.msra.mxu0 0
        %394 = vmatprep.subr.bf16.mxu0 0
        %395 = vmatpush1.bf16.msra.mxu0 0
        %396 = vmatprep.subr.bf16.mxu0 0
        %397 = vmatpush1.bf16.msra.mxu0 0
        %398 = vmatprep.subr.bf16.mxu0 0
        %399 = vmatpush1.bf16.msra.mxu0 0
        %400 = vmatprep.subr.bf16.mxu0 0
        %401 = vmatpush1.bf16.msra.mxu0 0
        %402 = vmatprep.mubr.bf16.mxu0 0
        %403 = vmatmul.mubr.bf16.gmra.mrb[0].mxu0 %v288
        %v404 = vpop.f32.mrb[0].mxu0
        %v405 = vadd.f32 0.0, %v404
        %v406 = vpop.f32.mrb[0].mxu0
        %v407 = vadd.f32 0.0, %v406
        %v408 = vpop.f32.mrb[0].mxu0
        %v409 = vadd.f32 0.0, %v408
        %v410 = vpop.f32.mrb[0].mxu0
        %v411 = vadd.f32 0.0, %v410
        %412 = vdwg.mxu0
        %v413 = vxor.u32 %v405, 2147483648
        %v414 = vxor.u32 %v409, 2147483648
        %v415 = vmul.f32 %v413, 1.442695
        %v416 = vpow.pop %v415
        %v417 = vmul.f32 %v414, 1.442695
        %v418 = vpow.pop %v417
        %v419 = vadd.f32 %v416, 1.0
        %v420 = vadd.f32 %v418, 1.0
        %v421 = vrcp.pop %v419
        %v422 = vmul.f32 1.0, %v421
        %v423 = vrcp.pop %v420
        %v424 = vmul.f32 1.0, %v423
        %v425 = vmul.f32 %v405, %v422
        %v426 = vmul.f32 %v409, %v424
        %v427 = vmul.f32 %v425, %v407
        %v428 = vmul.f32 %v426, %v411
        %v429 = vld [vmem:[#allocation2] sm:$0xff]
        %v430 = vld [vmem:[#allocation2 + $0x8] sm:$0xff]
        %v431 = vpack.c.bf16 %v428, %v427
        %v432 = vld [vmem:[%s222] sm:$0xf]
        %v433 = vld [vmem:[%s222 + $0x4] sm:$0xf]
        %v434 = vld [vmem:[%s222 + $0x8] sm:$0xf]
        %v435 = vld [vmem:[%s222 + $0xc] sm:$0xf]
        %v436 = vld [vmem:[%s222 + $0x10] sm:$0xf]
        %v437 = vld [vmem:[%s222 + $0x14] sm:$0xf]
        %v438 = vld [vmem:[%s222 + $0x18] sm:$0xf]
        %v439 = vld [vmem:[%s222 + $0x1c] sm:$0xf]
        %v440 = vld [vmem:[%s222 + $0x20] sm:$0xf]
        %v441 = vld [vmem:[%s222 + $0x24] sm:$0xf]
        %v442 = vld [vmem:[%s222 + $0x28] sm:$0xf]
        %v443 = vld [vmem:[%s222 + $0x2c] sm:$0xf]
        %v444 = vld [vmem:[%s222 + $0x30] sm:$0xf]
        %v445 = vld [vmem:[%s222 + $0x34] sm:$0xf]
        %v446 = vld [vmem:[%s222 + $0x38] sm:$0xf]
        %v447 = vld [vmem:[%s222 + $0x3c] sm:$0xf]
        %v464 = vunpack.c.l.b16 %v432
        %v465 = vunpack.c.l.b16 %v433
        %v466 = vunpack.c.l.b16 %v434
        %v467 = vunpack.c.l.b16 %v435
        %v468 = vunpack.c.l.b16 %v436
        %v469 = vunpack.c.l.b16 %v437
        %v470 = vunpack.c.l.b16 %v438
        %v471 = vunpack.c.l.b16 %v439
        %v472 = vunpack.c.l.b16 %v440
        %v473 = vunpack.c.l.b16 %v441
        %v474 = vunpack.c.l.b16 %v442
        %v475 = vunpack.c.l.b16 %v443
        %v476 = vunpack.c.l.b16 %v444
        %v477 = vunpack.c.l.b16 %v445
        %v478 = vunpack.c.l.b16 %v446
        %v479 = vunpack.c.l.b16 %v447
        %v480 = vpack.c.b16 %v465, %v464
        %v481 = vpack.c.b16 %v467, %v466
        %v482 = vpack.c.b16 %v469, %v468
        %v483 = vpack.c.b16 %v471, %v470
        %v484 = vpack.c.b16 %v473, %v472
        %v485 = vpack.c.b16 %v475, %v474
        %v486 = vpack.c.b16 %v477, %v476
        %v487 = vpack.c.b16 %v479, %v478
        %496 = vmatprep.subr.bf16.mxu0 0
        %497 = vmatpush1.bf16.msra.mxu0 %v480
        %498 = vmatprep.subr.bf16.mxu0 0
        %499 = vmatpush1.bf16.msra.mxu0 %v481
        %500 = vmatprep.subr.bf16.mxu0 0
        %501 = vmatpush1.bf16.msra.mxu0 %v482
        %502 = vmatprep.subr.bf16.mxu0 0
        %503 = vmatpush1.bf16.msra.mxu0 %v483
        %504 = vmatprep.subr.bf16.mxu0 0
        %505 = vmatpush1.bf16.msra.mxu0 %v484
        %506 = vmatprep.subr.bf16.mxu0 0
        %507 = vmatpush1.bf16.msra.mxu0 %v485
        %508 = vmatprep.subr.bf16.mxu0 0
        %509 = vmatpush1.bf16.msra.mxu0 %v486
        %510 = vmatprep.subr.bf16.mxu0 0
        %511 = vmatpush1.bf16.msra.mxu0 %v487
        %512 = vmatprep.subr.bf16.mxu0 0
        %513 = vmatpush1.bf16.msra.mxu0 0
        %514 = vmatprep.subr.bf16.mxu0 0
        %515 = vmatpush1.bf16.msra.mxu0 0
        %516 = vmatprep.subr.bf16.mxu0 0
        %517 = vmatpush1.bf16.msra.mxu0 0
        %518 = vmatprep.subr.bf16.mxu0 0
        %519 = vmatpush1.bf16.msra.mxu0 0
        %520 = vmatprep.subr.bf16.mxu0 0
        %521 = vmatpush1.bf16.msra.mxu0 0
        %522 = vmatprep.subr.bf16.mxu0 0
        %523 = vmatpush1.bf16.msra.mxu0 0
        %524 = vmatprep.subr.bf16.mxu0 0
        %525 = vmatpush1.bf16.msra.mxu0 0
        %526 = vmatprep.subr.bf16.mxu0 0
        %527 = vmatpush1.bf16.msra.mxu0 0
        %528 = vmatprep.mubr.bf16.mxu0 0
        %529 = vmatmul.mubr.bf16.gmra.mrb[0].mxu0 %v431
        %v530 = vpop.f32.mrb[0].mxu0
        %v531 = vadd.f32 0.0, %v530
        %v532 = vpop.f32.mrb[0].mxu0
        %v533 = vpop.f32.mrb[0].mxu0
        %v534 = vadd.f32 0.0, %v533
        %v535 = vpop.f32.mrb[0].mxu0
        %536 = vdwg.mxu0
        %v537 = vadd.f32 %v429, %v531
        %v538 = vadd.f32 %v430, %v534
        %539 = vst [vmem:[#allocation2] sm:$0xff] %v537
        %540 = vst [vmem:[#allocation2 + $0x8] sm:$0xff] %v538
        %p541 = scmp.eq.s32.totalorder %s26, 2
        // Predicated region
        $region45: #{feed_forward.1} parent=31 // pred_check
          %p542 = pneg %p541
        $region46: #{feed_forward.1} parent=31 // pred_check_branch
          %544 = sbr.rel (%p542) target = $region48
        $region47: #{feed_forward.1} parent=31 // pred_region
          %v545 = vld [vmem:[#allocation2] sm:$0xff]
          %v546 = vld [vmem:[#allocation2 + $0x8] sm:$0xff]
          %547 = vst [vmem:[#allocation8] sm:$0xff] %v545
          %548 = vst [vmem:[#allocation8 + $0x8] sm:$0xff] %v546
        $region48: #{feed_forward.1} parent=31 // pred_fallthru
          _
        // Predicated region
        $region49: #{feed_forward.1} parent=31 // pred_check
          %p549 = pneg %p129
        $region50: #{feed_forward.1} parent=31 // pred_check_branch
          %551 = sbr.rel (%p549) target = $region52
        $region51: #{feed_forward.1} parent=31 // pred_region
          %s552 = smul.u32 2, %s25
          %s554 = ssub.s32 256, 256
          %555 = vsyncadd [#allocation5], %s554
          %s556 = smul.addr %s552, 128
          %s557 = scalar_lea.hbm %s3, %s556
          %s558 = sshll.u32 [#allocation8], 4
          %s559 = int_to_ptr.vmem [resolvable:$true] %s558
          %564 = dma.vmem_to_hbm [thread:$0]  %s559, 256, %s557, [#allocation5], 128, 128, 8
        $region52: #{feed_forward.1} parent=31 // pred_fallthru
          _
        // Predicated region
        $region53: #{feed_forward.1} parent=31 // pred_check
          %p565 = pneg %p129
        $region54: #{feed_forward.1} parent=31 // pred_check_branch
          %567 = sbr.rel (%p565) target = $region56
        $region55: #{feed_forward.1} parent=31 // pred_region
          %568 = dma.done [#allocation5], 256
        $region56: #{feed_forward.1} parent=31 // pred_fallthru
          _
      $region32: #{feed_forward.1} parent=5 // pred_fallthru
        _
      %p569 = scmp.le.s32.totalorder 2, %s16
      // Predicated region
      $region57: #{feed_forward.1} parent=5 // pred_check
        %p570 = pneg %p569
      $region58: #{feed_forward.1} parent=5 // pred_check_branch
        %572 = sbr.rel (%p570) target = $region60
      $region59: #{feed_forward.1} parent=5 // pred_region
        %s573 = ssub.s32 %s16, 2
      $region60: #{feed_forward.1} parent=5 // pred_fallthru
        _
    $region6: #{feed_forward.1} parent=1 // loop_footer
      %s20 = sadd.s32 1, %s16
    $region7: #{feed_forward.1} parent=1 // loop_footer_branch
      %15 = sbr.rel target = $region3
    $region8: #{feed_forward.1} parent=1 // loop_exit
      _
    %574 = vsyncpa [#allocation4], 1
    %s575 = scalar_lea.sflag [#allocation4], 1
    %576 = vsyncpa %s575, 1
    %577 = vsyncpa [#allocation7], 1
    %s578 = scalar_lea.sflag [#allocation7], 1
    %579 = vsyncpa %s578, 1
    %580 = vsyncpa [#allocation5], 1
    %s581 = scalar_lea.sflag [#allocation5], 1
    %582 = vsyncpa %s581, 1

</llo_original>
